<compile_context>
chip_gen: v5e
topology: v5e:2x2
jax: 0.10.0
libtpu: 0.0.40
codegen_flags: <defaults>
</compile_context>

<pallas_src>
import functools

import jax
import jax.numpy as jnp
import numpy as np
from jax import lax
from jax.experimental import pallas as pl
from jax.experimental.pallas import tpu as pltpu

NEG_SLOPE = 0.01  # nn.LeakyReLU default negative_slope


def _resnet_block_kernel(x_ref, t_ref, b_ref, o_ref, *, img_rows,
                         imgs_per_block):
    """One row-block (imgs_per_block whole images) per grid step.

    x_ref:  (TM, W*Cin)          input rows, (W, C) flattened onto the lane axis
    t_ref:  (3, W*Cin, W*Cout)   banded conv weights, one per kh tap (bf16)
    b_ref:  (1, W*Cout)          bias tiled over width (f32)
    o_ref:  (TM, W*Cout)         output rows
    """
    TM = x_ref.shape[0]
    WCout = o_ref.shape[1]
    H = img_rows

    x = x_ref[...]                          # (TM, W*Cin) f32
    xb = x.astype(jnp.bfloat16)             # single bf16 MXU operand copy

    # kh == 1 (center) tap: full-M matmul, M = imgs_per_block * H rows.
    acc = jnp.dot(xb, t_ref[1], preferred_element_type=jnp.float32)

    zrow = jnp.zeros((1, WCout), jnp.float32)

    # kh == 0 tap: out[r] += x[r-1] @ T0.  Slice the operand at matmul time
    # (no shifted bf16 copy of x); place the f32 result one row down; the zero
    # row reproduces the 'same' zero padding at the top of the block.
    up = jnp.dot(xb[:TM - 1, :], t_ref[0], preferred_element_type=jnp.float32)
    up = jnp.concatenate([zrow, up], axis=0)

    # kh == 2 tap: out[r] += x[r+1] @ T2 (zero padding at the bottom).
    dn = jnp.dot(xb[1:, :], t_ref[2], preferred_element_type=jnp.float32)
    dn = jnp.concatenate([dn, zrow], axis=0)

    if imgs_per_block > 1:
        # Several whole images are stacked along M: zero the tap rows whose
        # shifted source row belongs to the neighbouring image (per-image
        # 'same' zero padding along H at block-internal image boundaries).
        row = lax.broadcasted_iota(jnp.int32, (TM, 1), 0)
        up = jnp.where(row % H == 0, 0.0, up)
        dn = jnp.where(row % H == H - 1, 0.0, dn)

    out = acc + up + dn + b_ref[...] + x      # conv + bias + identity residual
    o_ref[...] = jnp.where(out >= 0, out, NEG_SLOPE * out).astype(o_ref.dtype)


def _toeplitz_weights(w_oihw, W):
    """Fold the kw taps and the width axis into the matmul contraction.

    T[kh, w_in*Cin + cin, w_out*Cout + cout] =
        weight[cout, cin, kh, w_in - w_out + 1]   if |w_in - w_out| <= 1
        0                                         otherwise
    The band structure implements the 'same' zero padding along W.  Kept
    because W*C is tiny here (see header TODO for the im2col restructure at
    realistic sizes).
    """
    Cin, Cout = w_oihw.shape[1], w_oihw.shape[0]
    w_hwio = jnp.transpose(w_oihw, (2, 3, 1, 0))            # (3, 3, Cin, Cout)
    wi = np.arange(W)
    d = wi[:, None] - wi[None, :]                           # w_in - w_out
    kw_idx = np.clip(d + 1, 0, 2)                           # (W, W) tap index
    valid = (np.abs(d) <= 1).astype(np.float32)             # (W, W) band mask
    t = w_hwio[:, kw_idx, :, :]                             # (3, W, W, Cin, Cout)
    t = t * jnp.asarray(valid)[None, :, :, None, None]
    t = jnp.transpose(t, (0, 1, 3, 2, 4)).reshape(3, W * Cin, W * Cout)
    return t.astype(jnp.bfloat16)                           # MXU-native operands


def resnet_block_nhwc(x_nhwc, w_oihw, b, *, block_rows=256):
    """ResnetBlock forward, channels-last (NHWC) -- preferred entry point.

    Only free contiguous reshapes around the kernel; no HBM transpose passes.
    """
    N, H, W, C = x_nhwc.shape
    Cout, Cin, KH, KW = w_oihw.shape
    assert (KH, KW) == (3, 3) and Cin == C
    assert Cout == Cin, "identity residual requires Cin == Cout"

    WCin, WCout = W * Cin, W * Cout
    rows = N * H

    # (N, H, W, C) -> (N*H, W*C): contiguous reshape, pure layout plumbing.
    x_rows = x_nhwc.reshape(rows, WCin)

    t = _toeplitz_weights(w_oihw, W)                        # (3, W*Cin, W*Cout)
    b_tiled = jnp.tile(b.astype(jnp.float32), W).reshape(1, WCout)

    # Row-blocks hold whole images so blocks are independent and the per-image
    # padding can be applied in-kernel.  block_rows is the per-generation
    # tuning knob: ~128 rows saturates v5e's 128-deep MXU, 256-512 suits
    # v6e/v7x (and gives each v7x TensorCore several pipelined grid steps once
    # N*H >> block_rows).
    imgs_per_block = max(1, min(N, max(block_rows, H) // H))
    while N % imgs_per_block:
        imgs_per_block -= 1
    TM = imgs_per_block * H
    grid = (rows // TM,)

    kernel = functools.partial(_resnet_block_kernel,
                               img_rows=H, imgs_per_block=imgs_per_block)

    itemsize = jnp.dtype(x_nhwc.dtype).itemsize
    cost = pl.CostEstimate(
        flops=2 * N * H * W * 9 * Cin * Cout,
        transcendentals=0,
        bytes_accessed=(rows * WCin * itemsize + int(t.size) * 2
                        + int(b_tiled.size) * 4 + rows * WCout * itemsize))

    out = pl.pallas_call(
        kernel,
        out_shape=jax.ShapeDtypeStruct((rows, WCout), x_nhwc.dtype),
        grid=grid,
        in_specs=[
            pl.BlockSpec((TM, WCin), lambda i: (i, 0)),
            # Constant block index: the pipeline keeps the weight resident.
            # TODO(synk): single-buffer it (pl.Buffered(1) / one-shot DMA) at
            # large W*C so it is not double-buffered on v7x's 64 MiB VMEM.
            pl.BlockSpec((3, WCin, WCout), lambda i: (0, 0, 0)),
            pl.BlockSpec((1, WCout), lambda i: (0, 0)),
        ],
        out_specs=pl.BlockSpec((TM, WCout), lambda i: (i, 0)),
        compiler_params=pltpu.CompilerParams(
            # image-aligned row blocks are independent -> megacore shardable.
            dimension_semantics=("parallel",),
            vmem_limit_bytes=64 * 1024 * 1024),
        cost_estimate=cost,
    )(x_rows, t, b_tiled)

    return out.reshape(N, H, W, Cout)


def resnet_block(x_nchw, w_oihw, b, *, block_rows=256):
    """PyTorch NCHW-convention wrapper around resnet_block_nhwc.

    The two transposes below are full HBM passes executed by XLA and exist
    only for API parity with the NCHW PyTorch module; in a channels-last model
    call resnet_block_nhwc directly and they disappear.
    """
    x_nhwc = jnp.transpose(x_nchw, (0, 2, 3, 1))
    out = resnet_block_nhwc(x_nhwc, w_oihw, b, block_rows=block_rows)
    return jnp.transpose(out, (0, 3, 1, 2))


def reference(x_nchw, w_oihw, b):
    """Pure-JAX reference (lax conv) for correctness checking."""
    conv = lax.conv_general_dilated(
        x_nchw, w_oihw,
        window_strides=(1, 1),
        padding=((1, 1), (1, 1)),
        dimension_numbers=("NCHW", "OIHW", "NCHW"),
    )
    out = conv + b[None, :, None, None] + x_nchw
    return jnp.where(out >= 0, out, NEG_SLOPE * out)


if __name__ == "__main__":
    key = jax.random.PRNGKey(0)
    kx, kw, kb = jax.random.split(key, 3)

    N, C, H, W = 2, 4, 16, 16
    x = jax.random.normal(kx, (N, C, H, W), dtype=jnp.float32)
    # deterministic synthetic conv params (Cout == Cin == C, 3x3 kernel)
    w = jax.random.normal(kw, (C, C, 3, 3), dtype=jnp.float32) * 0.1
    b = jax.random.normal(kb, (C,), dtype=jnp.float32) * 0.1

    out = resnet_block(x, w, b)
    out = jax.block_until_ready(out)

    ref = jax.block_until_ready(reference(x, w, b))
    assert out.shape == (N, C, H, W)
    # bf16 MXU operands (f32 accumulation) -> looser tolerance than pure f32.
    np.testing.assert_allclose(np.asarray(out), np.asarray(ref),
                               rtol=3e-2, atol=3e-2)
    print("KERNEL_OK")
</pallas_src>

<mosaic_0001>
module attributes {stable_mosaic.version = 11 : i64} {
  func.func @_resnet_block_kernel(%arg0: i32, %arg1: memref<32x64xf32, #tpu.memory_space<vmem>>, %arg2: memref<3x64x64xbf16, #tpu.memory_space<vmem>>, %arg3: memref<1x64xf32, #tpu.memory_space<vmem>>, %arg4: memref<32x64xf32, #tpu.memory_space<vmem>>) attributes {dimension_semantics = [#tpu.dimension_semantics<parallel>], iteration_bounds = array<i64: 1>, scalar_prefetch = 0 : i64, scratch_operands = 0 : i64, tpu.core_type = #tpu.core_type<tc>, window_params = [{transform_indices = @transform_0, window_bounds = array<i64: 32, 64>}, {pipeline_mode = #tpu.pipeline_mode<synchronous>, transform_indices = @transform_1, window_bounds = array<i64: 3, 64, 64>}, {pipeline_mode = #tpu.pipeline_mode<synchronous>, transform_indices = @transform_2, window_bounds = array<i64: 1, 64>}, {transform_indices = @transform_3, window_bounds = array<i64: 32, 64>}]} {
    %c0 = arith.constant 0 : index
    %c0_0 = arith.constant 0 : index
    %0 = vector.load %arg1[%c0, %c0_0] : memref<32x64xf32, #tpu.memory_space<vmem>>, vector<32x64xf32>
    %1 = arith.truncf %0 : vector<32x64xf32> to vector<32x64xbf16>
    %c1 = arith.constant 1 : index
    %c0_1 = arith.constant 0 : index
    %c0_2 = arith.constant 0 : index
    %2 = vector.load %arg2[%c1, %c0_1, %c0_2] : memref<3x64x64xbf16, #tpu.memory_space<vmem>>, vector<1x64x64xbf16>
    %3 = vector.shape_cast %2 : vector<1x64x64xbf16> to vector<64x64xbf16>
    %cst = arith.constant dense<0.000000e+00> : vector<32x64xf32>
    %4 = tpu.matmul %1, %3, %cst {dimension_numbers = #tpu.dot_dimension_numbers<[1], [0], [0], [1], [0, 0, 1, 1], [], []>} : vector<32x64xbf16>, vector<64x64xbf16>, vector<32x64xf32> -> vector<32x64xf32>
    %cst_3 = arith.constant 0.000000e+00 : f32
    %5 = vector.broadcast %cst_3 : f32 to vector<1x64xf32>
    %6 = vector.extract_strided_slice %1 {offsets = [0, 0], sizes = [31, 64], strides = [1, 1]} : vector<32x64xbf16> to vector<31x64xbf16>
    %c0_4 = arith.constant 0 : index
    %c0_5 = arith.constant 0 : index
    %c0_6 = arith.constant 0 : index
    %7 = vector.load %arg2[%c0_4, %c0_5, %c0_6] : memref<3x64x64xbf16, #tpu.memory_space<vmem>>, vector<1x64x64xbf16>
    %8 = vector.shape_cast %7 : vector<1x64x64xbf16> to vector<64x64xbf16>
    %cst_7 = arith.constant dense<0.000000e+00> : vector<31x64xf32>
    %9 = tpu.matmul %6, %8, %cst_7 {dimension_numbers = #tpu.dot_dimension_numbers<[1], [0], [0], [1], [0, 0, 1, 1], [], []>} : vector<31x64xbf16>, vector<64x64xbf16>, vector<31x64xf32> -> vector<31x64xf32>
    %10 = tpu.concatenate %5, %9 in 0 : vector<1x64xf32>, vector<31x64xf32> -> vector<32x64xf32>
    %11 = vector.extract_strided_slice %1 {offsets = [1, 0], sizes = [31, 64], strides = [1, 1]} : vector<32x64xbf16> to vector<31x64xbf16>
    %c2 = arith.constant 2 : index
    %c0_8 = arith.constant 0 : index
    %c0_9 = arith.constant 0 : index
    %12 = vector.load %arg2[%c2, %c0_8, %c0_9] : memref<3x64x64xbf16, #tpu.memory_space<vmem>>, vector<1x64x64xbf16>
    %13 = vector.shape_cast %12 : vector<1x64x64xbf16> to vector<64x64xbf16>
    %cst_10 = arith.constant dense<0.000000e+00> : vector<31x64xf32>
    %14 = tpu.matmul %11, %13, %cst_10 {dimension_numbers = #tpu.dot_dimension_numbers<[1], [0], [0], [1], [0, 0, 1, 1], [], []>} : vector<31x64xbf16>, vector<64x64xbf16>, vector<31x64xf32> -> vector<31x64xf32>
    %15 = tpu.concatenate %14, %5 in 0 : vector<31x64xf32>, vector<1x64xf32> -> vector<32x64xf32>
    %16 = tpu.iota {dimensions = array<i32: 0>} : vector<32x1xi32>
    %c16_i32 = arith.constant 16 : i32
    %c0_i32 = arith.constant 0 : i32
    %17 = arith.cmpi eq, %c16_i32, %c0_i32 : i32
    %c1_i32 = arith.constant 1 : i32
    %18 = arith.select %17, %c1_i32, %c16_i32 : i32
    %19 = vector.broadcast %18 : i32 to vector<32x1xi32>
    %20 = arith.remsi %16, %19 : vector<32x1xi32>
    %c0_i32_11 = arith.constant 0 : i32
    %21 = vector.broadcast %c0_i32_11 : i32 to vector<32x1xi32>
    %22 = arith.cmpi ne, %20, %21 : vector<32x1xi32>
    %c0_i32_12 = arith.constant 0 : i32
    %23 = vector.broadcast %c0_i32_12 : i32 to vector<32x1xi32>
    %24 = arith.cmpi slt, %20, %23 : vector<32x1xi32>
    %c0_i32_13 = arith.constant 0 : i32
    %25 = arith.cmpi slt, %18, %c0_i32_13 : i32
    %26 = vector.broadcast %25 : i1 to vector<32x1xi1>
    %27 = vector.broadcast %26 : vector<32x1xi1> to vector<32x1xi1>
    %28 = arith.xori %24, %27 : vector<32x1xi1>
    %29 = arith.andi %28, %22 : vector<32x1xi1>
    %30 = vector.broadcast %18 : i32 to vector<32x1xi32>
    %31 = arith.addi %20, %30 : vector<32x1xi32>
    %32 = arith.select %29, %31, %20 : vector<32x1xi1>, vector<32x1xi32>
    %c0_i32_14 = arith.constant 0 : i32
    %33 = vector.broadcast %c0_i32_14 : i32 to vector<32x1xi32>
    %34 = arith.cmpi eq, %32, %33 : vector<32x1xi32>
    %cst_15 = arith.constant 0.000000e+00 : f32
    %35 = vector.shape_cast %34 : vector<32x1xi1> to vector<32x1xi1>
    %36 = vector.broadcast %35 : vector<32x1xi1> to vector<32x64xi1>
    %37 = vector.broadcast %cst_15 : f32 to vector<32x64xf32>
    %38 = arith.select %36, %37, %10 : vector<32x64xi1>, vector<32x64xf32>
    %c16_i32_16 = arith.constant 16 : i32
    %c0_i32_17 = arith.constant 0 : i32
    %39 = arith.cmpi eq, %c16_i32_16, %c0_i32_17 : i32
    %c1_i32_18 = arith.constant 1 : i32
    %40 = arith.select %39, %c1_i32_18, %c16_i32_16 : i32
    %41 = vector.broadcast %40 : i32 to vector<32x1xi32>
    %42 = arith.remsi %16, %41 : vector<32x1xi32>
    %c0_i32_19 = arith.constant 0 : i32
    %43 = vector.broadcast %c0_i32_19 : i32 to vector<32x1xi32>
    %44 = arith.cmpi ne, %42, %43 : vector<32x1xi32>
    %c0_i32_20 = arith.constant 0 : i32
    %45 = vector.broadcast %c0_i32_20 : i32 to vector<32x1xi32>
    %46 = arith.cmpi slt, %42, %45 : vector<32x1xi32>
    %c0_i32_21 = arith.constant 0 : i32
    %47 = arith.cmpi slt, %40, %c0_i32_21 : i32
    %48 = vector.broadcast %47 : i1 to vector<32x1xi1>
    %49 = vector.broadcast %48 : vector<32x1xi1> to vector<32x1xi1>
    %50 = arith.xori %46, %49 : vector<32x1xi1>
    %51 = arith.andi %50, %44 : vector<32x1xi1>
    %52 = vector.broadcast %40 : i32 to vector<32x1xi32>
    %53 = arith.addi %42, %52 : vector<32x1xi32>
    %54 = arith.select %51, %53, %42 : vector<32x1xi1>, vector<32x1xi32>
    %c15_i32 = arith.constant 15 : i32
    %55 = vector.broadcast %c15_i32 : i32 to vector<32x1xi32>
    %56 = arith.cmpi eq, %54, %55 : vector<32x1xi32>
    %cst_22 = arith.constant 0.000000e+00 : f32
    %57 = vector.shape_cast %56 : vector<32x1xi1> to vector<32x1xi1>
    %58 = vector.broadcast %57 : vector<32x1xi1> to vector<32x64xi1>
    %59 = vector.broadcast %cst_22 : f32 to vector<32x64xf32>
    %60 = arith.select %58, %59, %15 : vector<32x64xi1>, vector<32x64xf32>
    %61 = arith.addf %4, %38 : vector<32x64xf32>
    %62 = arith.addf %61, %60 : vector<32x64xf32>
    %c0_23 = arith.constant 0 : index
    %c0_24 = arith.constant 0 : index
    %63 = vector.load %arg3[%c0_23, %c0_24] : memref<1x64xf32, #tpu.memory_space<vmem>>, vector<1x64xf32>
    %64 = vector.broadcast %63 : vector<1x64xf32> to vector<32x64xf32>
    %65 = arith.addf %62, %64 : vector<32x64xf32>
    %66 = arith.addf %65, %0 : vector<32x64xf32>
    %cst_25 = arith.constant 0.000000e+00 : f32
    %67 = vector.broadcast %cst_25 : f32 to vector<32x64xf32>
    %68 = arith.cmpf oge, %66, %67 : vector<32x64xf32>
    %cst_26 = arith.constant 0.00999999977 : f32
    %69 = vector.broadcast %cst_26 : f32 to vector<32x64xf32>
    %70 = arith.mulf %69, %66 : vector<32x64xf32>
    %71 = arith.select %68, %66, %70 : vector<32x64xi1>, vector<32x64xf32>
    %c0_27 = arith.constant 0 : index
    %c0_28 = arith.constant 0 : index
    %72 = vector.load %arg4[%c0_27, %c0_28] : memref<32x64xf32, #tpu.memory_space<vmem>>, vector<32x64xf32>
    tpu.vector_store %arg4[%c0_27, %c0_28], %71 {strides = array<i32>} : memref<32x64xf32, #tpu.memory_space<vmem>>, vector<32x64xf32>,
    return
  }
  func.func @transform_0(%arg0: i32) -> (i32, i32) {
    %c0_i32 = arith.constant 0 : i32
    %c0_i32_0 = arith.constant 0 : i32
    return %arg0, %c0_i32 : i32, i32
  }
  func.func @transform_1(%arg0: i32) -> (i32, i32, i32) {
    %c0_i32 = arith.constant 0 : i32
    %c0_i32_0 = arith.constant 0 : i32
    %c0_i32_1 = arith.constant 0 : i32
    %c0_i32_2 = arith.constant 0 : i32
    return %c0_i32, %c0_i32_0, %c0_i32_1 : i32, i32, i32
  }
  func.func @transform_2(%arg0: i32) -> (i32, i32) {
    %c0_i32 = arith.constant 0 : i32
    %c0_i32_0 = arith.constant 0 : i32
    %c0_i32_1 = arith.constant 0 : i32
    return %c0_i32, %c0_i32_0 : i32, i32
  }
  func.func @transform_3(%arg0: i32) -> (i32, i32) {
    %c0_i32 = arith.constant 0 : i32
    %c0_i32_0 = arith.constant 0 : i32
    return %arg0, %c0_i32 : i32, i32
  }
}

</mosaic_0001>

<llo_original>
// kernel: tpu_custom_call.1
$region0: #{tpu_custom_call.1}
  #allocation0 [shape = 'u32[]', space=smem, size = 0x4, offset = 0x4, fixed_abs, tag = 'smem constant byte address 0x4 - core index']
  #allocation1 [shape = 'u32[72,128]{1,0:T(1,128)}', space=vmem, size = 0x9000, scoped, tag = 'internal scratch']
  %s0 = inlined_call_operand.hbm [shape: f32[32,64], index: 0, kind: input, shape index: {}]
  %s1 = inlined_call_operand.hbm [shape: bf16[3,64,64], index: 1, kind: input, shape index: {}]
  %s2 = inlined_call_operand.vmem [shape: f32[1,64], index: 2, kind: input, shape index: {}]
  %s3 = inlined_call_operand.hbm [shape: f32[32,64], index: 3, kind: output, shape index: {}]
  %s4 = sld [smem:[#allocation0]]
  $region30: #{tpu_custom_call.1} parent=0
    _
  %s6 = ssub.s32 1, %s4
  %s7 = scalar_select 0, %s6, %s4
  $region1: #{tpu_custom_call.1} parent=0
    #allocation2 [shape = 'u8[16384]{0}', space=vmem, size = 0x4000, scoped, tag = 'input window, operand 0, single buffered']
    #allocation3 [shape = 's32[1]{0}', space=sflag, size = 0x4, scoped, tag = 'scoped memory for tpu_custom_call.1']
    #allocation4 [shape = 's32[1]{0}', space=sflag, size = 0x4, scoped, tag = 'scoped memory for tpu_custom_call.1']
    #allocation5 [shape = 'u8[49152]{0}', space=vmem, size = 0xc000, scoped, tag = 'input window, operand 1, single buffered']
    #allocation6 [shape = 's32[1]{0}', space=sflag, size = 0x4, scoped, tag = 'scoped memory for tpu_custom_call.1']
    #allocation7 [shape = 'u8[16384]{0}', space=vmem, size = 0x4000, scoped, tag = 'output window, operand 0, single buffered']
    %8 = vsyncpa [#allocation3], 0
    %9 = vsyncpa [#allocation6], 0
    %10 = vsyncpa [#allocation4], 0
    // Predicated region
    $region2: #{tpu_custom_call.1} parent=1 // pred_check
      _
    $region3: #{tpu_custom_call.1} parent=1 // pred_check_branch
      %12 = sbr.rel (0) target = $region5
    $region4: #{tpu_custom_call.1} parent=1 // pred_region
      %14 = vsyncadd [#allocation3], 0
      %s15 = sshll.u32 %s0, 4
      %s16 = int_to_ptr.hbm [resolvable:$true] %s15
      %s17 = sshll.u32 [#allocation2], 4
      %s18 = int_to_ptr.vmem [resolvable:$true] %s17
      %23 = dma.hbm_to_vmem [thread:$0]  %s16, 512, %s18, [#allocation3], 128, 128, 8
    $region5: #{tpu_custom_call.1} parent=1 // pred_fallthru
      _
    // Predicated region
    $region6: #{tpu_custom_call.1} parent=1 // pred_check
      _
    $region7: #{tpu_custom_call.1} parent=1 // pred_check_branch
      %25 = sbr.rel (0) target = $region9
    $region8: #{tpu_custom_call.1} parent=1 // pred_region
      %27 = vsyncadd [#allocation6], 0
      %s28 = sshll.u32 %s1, 4
      %s29 = int_to_ptr.hbm [resolvable:$true] %s28
      %s30 = sshll.u32 [#allocation5], 4
      %s31 = int_to_ptr.vmem [resolvable:$true] %s30
      %36 = dma.hbm_to_vmem [thread:$0]  %s29, 1536, %s31, [#allocation6], 64, 64, 4
    $region9: #{tpu_custom_call.1} parent=1 // pred_fallthru
      _
    // Predicated region
    $region10: #{tpu_custom_call.1} parent=1 // pred_check
      _
    $region11: #{tpu_custom_call.1} parent=1 // pred_check_branch
      %38 = sbr.rel (0) target = $region13
    $region12: #{tpu_custom_call.1} parent=1 // pred_region
      _
    $region13: #{tpu_custom_call.1} parent=1 // pred_fallthru
      _
    // Predicated region
    $region14: #{tpu_custom_call.1} parent=1 // pred_check
      _
    $region15: #{tpu_custom_call.1} parent=1 // pred_check_branch
      %40 = sbr.rel (0) target = $region17
    $region16: #{tpu_custom_call.1} parent=1 // pred_region
      %42 = dma.done [#allocation3], 512
    $region17: #{tpu_custom_call.1} parent=1 // pred_fallthru
      _
    // Predicated region
    $region18: #{tpu_custom_call.1} parent=1 // pred_check
      _
    $region19: #{tpu_custom_call.1} parent=1 // pred_check_branch
      %44 = sbr.rel (0) target = $region21
    $region20: #{tpu_custom_call.1} parent=1 // pred_region
      %46 = dma.done [#allocation6], 1536
    $region21: #{tpu_custom_call.1} parent=1 // pred_fallthru
      _
    %v48 = vld [vmem:[#allocation2] sm:$0xff]
    %v49 = vld [vmem:[#allocation2 + $0x8] sm:$0xff]
    %v50 = vld [vmem:[#allocation2 + $0x10] sm:$0xff]
    %v51 = vld [vmem:[#allocation2 + $0x18] sm:$0xff]
    %v52 = vpack.c.bf16 %v48, %v48
    %v53 = vpack.c.bf16 %v49, %v49
    %v54 = vpack.c.bf16 %v50, %v50
    %v55 = vpack.c.bf16 %v51, %v51
    %s56 = scalar_lea.vmem [#allocation5], 32
    %v57 = vld [vmem:[%s56] sm:$0xf]
    %v58 = vld [vmem:[%s56 + $0x4] sm:$0xf]
    %v59 = vld [vmem:[%s56 + $0x8] sm:$0xf]
    %v60 = vld [vmem:[%s56 + $0xc] sm:$0xf]
    %v61 = vld [vmem:[%s56 + $0x10] sm:$0xf]
    %v62 = vld [vmem:[%s56 + $0x14] sm:$0xf]
    %v63 = vld [vmem:[%s56 + $0x18] sm:$0xf]
    %v64 = vld [vmem:[%s56 + $0x1c] sm:$0xf]
    %v65 = vld [vmem:[#allocation5] sm:$0xf]
    %v66 = vld [vmem:[#allocation5 + $0x4] sm:$0xf]
    %v67 = vld [vmem:[#allocation5 + $0x8] sm:$0xf]
    %v68 = vld [vmem:[#allocation5 + $0xc] sm:$0xf]
    %v69 = vld [vmem:[#allocation5 + $0x10] sm:$0xf]
    %v70 = vld [vmem:[#allocation5 + $0x14] sm:$0xf]
    %v71 = vld [vmem:[#allocation5 + $0x18] sm:$0xf]
    %v72 = vld [vmem:[#allocation5 + $0x1c] sm:$0xf]
    %v77 = vunpack.c.l.b16 %v52
    %v78 = vunpack.c.l.b16 %v53
    %v79 = vunpack.c.l.b16 %v54
    %v80 = vunpack.c.l.b16 %v55
    %v81 = vpack.c.b16 %v78, %v77
    %v82 = vpack.c.b16 %v80, %v79
    %v91 = vunpack.c.l.b16 %v65
    %v92 = vunpack.c.l.b16 %v66
    %v93 = vunpack.c.l.b16 %v67
    %v94 = vunpack.c.l.b16 %v68
    %v95 = vunpack.c.l.b16 %v69
    %v96 = vunpack.c.l.b16 %v70
    %v97 = vunpack.c.l.b16 %v71
    %v98 = vunpack.c.l.b16 %v72
    %v99 = vpack.c.b16 %v92, %v91
    %v100 = vpack.c.b16 %v94, %v93
    %v101 = vpack.c.b16 %v96, %v95
    %v102 = vpack.c.b16 %v98, %v97
    %vm107 = vcmask 523264
    %v109 = vsel %vm107, %v81, 0
    %v112 = vsel %vm107, %v82, 0
    %114 = vmatpush.bf16.msra.mxu0 0
    %115 = vmatpush.bf16.msra.mxu0 0
    %116 = vmatpush.bf16.msra.mxu0 0
    %117 = vmatpush.bf16.msra.mxu0 0
    %118 = vmatpush.bf16.msra.mxu0 %v102
    %119 = vmatpush.bf16.msra.mxu0 %v101
    %120 = vmatpush.bf16.msra.mxu0 %v100
    %121 = vmatpush.bf16.msra.mxu0 %v99
    %122 = vmatmul.bf16.gmra.mxu0 %v109
    %v123 = vpop.f32.mrf.mxu0
    %v124 = vadd.f32 0.0, %v123
    %v125 = vpop.f32.mrf.mxu0
    %v126 = vadd.f32 0.0, %v125
    %127 = vmatmul.bf16.gmra.mxu0 %v112
    %v128 = vpop.f32.mrf.mxu0
    %v129 = vadd.f32 0.0, %v128
    %v130 = vpop.f32.mrf.mxu0
    %v131 = vadd.f32 0.0, %v130
    %132 = vdwg.mxu0
    %vm137 = vcmask 1040384
    %v138 = vrot.slane %v124, 7
    %v139 = vrot.slane %v126, 7
    %v140 = vsel %vm137, %v138, %v139
    %v141 = vrot.slane %v129, 7
    %v142 = vsel %vm137, %v139, %v141
    %v143 = vrot.slane %v131, 7
    %v144 = vsel %vm137, %v141, %v143
    %v149 = vsel %vm137, 0.0, %v138
    %s150 = scalar_lea.vmem [#allocation5], 64
    %v151 = vld [vmem:[%s150] sm:$0xf]
    %v152 = vld [vmem:[%s150 + $0x4] sm:$0xf]
    %v153 = vld [vmem:[%s150 + $0x8] sm:$0xf]
    %v154 = vld [vmem:[%s150 + $0xc] sm:$0xf]
    %v155 = vld [vmem:[%s150 + $0x10] sm:$0xf]
    %v156 = vld [vmem:[%s150 + $0x14] sm:$0xf]
    %v157 = vld [vmem:[%s150 + $0x18] sm:$0xf]
    %v158 = vld [vmem:[%s150 + $0x1c] sm:$0xf]
    %vm159 = vsmask.f32 7424
    %v160 = vshrl.u32 %v81, 16
    %v162 = vshll.u32 %v81, 16
    %v164 = vrot.slane %v162, 1
    %v165 = vor.u32 %v160, %v164
    %v166 = vshll.u32 %v82, 16
    %v168 = vrot.slane %v166, 1
    %v169 = vsel %vm159, %v165, %v168
    %v170 = vshrl.u32 %v82, 16
    %v172 = vor.u32 %v170, %v168
    %v181 = vunpack.c.l.b16 %v151
    %v182 = vunpack.c.l.b16 %v152
    %v183 = vunpack.c.l.b16 %v153
    %v184 = vunpack.c.l.b16 %v154
    %v185 = vunpack.c.l.b16 %v155
    %v186 = vunpack.c.l.b16 %v156
    %v187 = vunpack.c.l.b16 %v157
    %v188 = vunpack.c.l.b16 %v158
    %v189 = vpack.c.b16 %v182, %v181
    %v190 = vpack.c.b16 %v184, %v183
    %v191 = vpack.c.b16 %v186, %v185
    %v192 = vpack.c.b16 %v188, %v187
    %v198 = vsel %vm107, %v169, 0
    %v201 = vsel %vm107, %v172, 0
    %203 = vmatpush.bf16.msra.mxu0 0
    %204 = vmatpush.bf16.msra.mxu0 0
    %205 = vmatpush.bf16.msra.mxu0 0
    %206 = vmatpush.bf16.msra.mxu0 0
    %207 = vmatpush.bf16.msra.mxu0 %v192
    %208 = vmatpush.bf16.msra.mxu0 %v191
    %209 = vmatpush.bf16.msra.mxu0 %v190
    %210 = vmatpush.bf16.msra.mxu0 %v189
    %211 = vmatmul.bf16.gmra.mxu0 %v198
    %v212 = vpop.f32.mrf.mxu0
    %v213 = vadd.f32 0.0, %v212
    %v214 = vpop.f32.mrf.mxu0
    %v215 = vadd.f32 0.0, %v214
    %216 = vmatmul.bf16.gmra.mxu0 %v201
    %v217 = vpop.f32.mrf.mxu0
    %v218 = vadd.f32 0.0, %v217
    %v219 = vpop.f32.mrf.mxu0
    %v220 = vadd.f32 0.0, %v219
    %221 = vdwg.mxu0
    %vm222 = vcmask 1046528
    %v223 = vsel %vm222, %v220, 0.0
    %v224 = vlaneseq
    %v225 = vshrl.u32 %v224, 7
    %v226 = vadd.s32 %v225, 8
    %v227 = vadd.s32 %v225, 16
    %v228 = vadd.s32 %v225, 24
    %vm229 = vcmp.lt.s32.totalorder %v225, 0
    %v230 = vsub.s32 0, %v225
    %v231 = vsel %vm229, %v230, %v225
    %v232 = vshrl.u32 %v231, 4
    %v233 = vand.u32 %v231, 15
    %v234 = vsub.s32 0, %v233
    %v235 = vsel %vm229, %v234, %v233
    %vm236 = vcmp.lt.s32.totalorder %v226, 0
    %v237 = vsub.s32 0, %v226
    %v238 = vsel %vm236, %v237, %v226
    %v239 = vshrl.u32 %v238, 4
    %v240 = vand.u32 %v238, 15
    %v241 = vsub.s32 0, %v240
    %v242 = vsel %vm236, %v241, %v240
    %vm243 = vcmp.lt.s32.totalorder %v227, 0
    %v244 = vsub.s32 0, %v227
    %v245 = vsel %vm243, %v244, %v227
    %v246 = vshrl.u32 %v245, 4
    %v247 = vand.u32 %v245, 15
    %v248 = vsub.s32 0, %v247
    %v249 = vsel %vm243, %v248, %v247
    %vm250 = vcmp.lt.s32.totalorder %v228, 0
    %v251 = vsub.s32 0, %v228
    %v252 = vsel %vm250, %v251, %v228
    %v253 = vshrl.u32 %v252, 4
    %v254 = vand.u32 %v252, 15
    %v255 = vsub.s32 0, %v254
    %v256 = vsel %vm250, %v255, %v254
    %vm257 = vcmp.ne.s32.totalorder %v235, 0
    %vm258 = vcmp.ne.s32.totalorder %v242, 0
    %vm259 = vcmp.ne.s32.totalorder %v249, 0
    %vm260 = vcmp.ne.s32.totalorder %v256, 0
    %vm261 = vcmp.lt.s32.totalorder %v235, 0
    %vm262 = vcmp.lt.s32.totalorder %v242, 0
    %vm263 = vcmp.lt.s32.totalorder %v249, 0
    %vm264 = vcmp.lt.s32.totalorder %v256, 0
    %vm265 = vmand %vm261, %vm257
    %vm266 = vmand %vm262, %vm258
    %vm267 = vmand %vm263, %vm259
    %vm268 = vmand %vm264, %vm260
    %v269 = vadd.s32 %v235, 16
    %v270 = vadd.s32 %v242, 16
    %v271 = vadd.s32 %v249, 16
    %v272 = vadd.s32 %v256, 16
    %v273 = vsel %vm265, %v269, %v235
    %v274 = vsel %vm266, %v270, %v242
    %v275 = vsel %vm267, %v271, %v249
    %v276 = vsel %vm268, %v272, %v256
    %vm277 = vcmp.eq.s32.totalorder %v273, 0
    %vm278 = vcmp.eq.s32.totalorder %v274, 0
    %vm279 = vcmp.eq.s32.totalorder %v275, 0
    %vm280 = vcmp.eq.s32.totalorder %v276, 0
    %v281 = vsel %vm277, 1, 0
    %v282 = vsel %vm278, 1, 0
    %v283 = vsel %vm279, 1, 0
    %v284 = vsel %vm280, 1, 0
    %vm285 = vcmp.eq.s32.totalorder %v281, 1
    %vm286 = vcmp.eq.s32.totalorder %v282, 1
    %vm287 = vcmp.eq.s32.totalorder %v283, 1
    %vm288 = vcmp.eq.s32.totalorder %v284, 1
    %v289 = vsel %vm285, 0.0, %v149
    %v290 = vsel %vm286, 0.0, %v140
    %v291 = vsel %vm287, 0.0, %v142
    %v292 = vsel %vm288, 0.0, %v144
    %vm293 = vcmp.eq.s32.totalorder %v273, 15
    %vm294 = vcmp.eq.s32.totalorder %v274, 15
    %vm295 = vcmp.eq.s32.totalorder %v275, 15
    %vm296 = vcmp.eq.s32.totalorder %v276, 15
    %v297 = vsel %vm293, 1, 0
    %v298 = vsel %vm294, 1, 0
    %v299 = vsel %vm295, 1, 0
    %v300 = vsel %vm296, 1, 0
    %vm301 = vcmp.eq.s32.totalorder %v297, 1
    %vm302 = vcmp.eq.s32.totalorder %v298, 1
    %vm303 = vcmp.eq.s32.totalorder %v299, 1
    %vm304 = vcmp.eq.s32.totalorder %v300, 1
    %v305 = vsel %vm301, 0.0, %v213
    %v306 = vsel %vm302, 0.0, %v215
    %v307 = vsel %vm303, 0.0, %v218
    %v308 = vsel %vm304, 0.0, %v223
    %v317 = vunpack.c.l.b16 %v57
    %v318 = vunpack.c.l.b16 %v58
    %v319 = vunpack.c.l.b16 %v59
    %v320 = vunpack.c.l.b16 %v60
    %v321 = vunpack.c.l.b16 %v61
    %v322 = vunpack.c.l.b16 %v62
    %v323 = vunpack.c.l.b16 %v63
    %v324 = vunpack.c.l.b16 %v64
    %v325 = vpack.c.b16 %v318, %v317
    %v326 = vpack.c.b16 %v320, %v319
    %v327 = vpack.c.b16 %v322, %v321
    %v328 = vpack.c.b16 %v324, %v323
    %333 = vmatpush.bf16.msra.mxu0 0
    %334 = vmatpush.bf16.msra.mxu0 0
    %335 = vmatpush.bf16.msra.mxu0 0
    %336 = vmatpush.bf16.msra.mxu0 0
    %337 = vmatpush.bf16.msra.mxu0 %v328
    %338 = vmatpush.bf16.msra.mxu0 %v327
    %339 = vmatpush.bf16.msra.mxu0 %v326
    %340 = vmatpush.bf16.msra.mxu0 %v325
    %341 = vmatmul.bf16.gmra.mxu0 %v109
    %v342 = vpop.f32.mrf.mxu0
    %v343 = vadd.f32 %v289, %v342
    %v344 = vpop.f32.mrf.mxu0
    %v345 = vadd.f32 %v290, %v344
    %346 = vmatmul.bf16.gmra.mxu0 %v112
    %v347 = vpop.f32.mrf.mxu0
    %v348 = vadd.f32 %v291, %v347
    %v349 = vpop.f32.mrf.mxu0
    %v350 = vadd.f32 %v292, %v349
    %351 = vdwg.mxu0
    %v352 = vadd.f32 %v343, %v305
    %v353 = vadd.f32 %v345, %v306
    %v354 = vadd.f32 %v348, %v307
    %v355 = vadd.f32 %v350, %v308
    %v356 = vld [vmem:[%s2] sm:$0x1]
    %v358 = vperm.slane %v356, 0
    %v360 = vadd.f32 %v352, %v358
    %v361 = vadd.f32 %v353, %v358
    %v362 = vadd.f32 %v354, %v358
    %v363 = vadd.f32 %v355, %v358
    %v364 = vadd.f32 %v360, %v48
    %v365 = vadd.f32 %v361, %v49
    %v366 = vadd.f32 %v362, %v50
    %v367 = vadd.f32 %v363, %v51
    %vm368 = vcmp.ge.f32.partialorder %v364, 0.0
    %vm369 = vcmp.ge.f32.partialorder %v365, 0.0
    %vm370 = vcmp.ge.f32.partialorder %v366, 0.0
    %vm371 = vcmp.ge.f32.partialorder %v367, 0.0
    %v372 = vmul.f32 %v364, 0.01
    %v373 = vmul.f32 %v365, 0.01
    %v374 = vmul.f32 %v366, 0.01
    %v375 = vmul.f32 %v367, 0.01
    %v376 = vsel %vm368, %v364, %v372
    %v377 = vsel %vm369, %v365, %v373
    %v378 = vsel %vm370, %v366, %v374
    %v379 = vsel %vm371, %v367, %v375
    %380 = vst.msk [vmem:[#allocation7] sm:$0xff] %vm107, %v376
    %381 = vst.msk [vmem:[#allocation7 + $0x8] sm:$0xff] %vm107, %v377
    %382 = vst.msk [vmem:[#allocation7 + $0x10] sm:$0xff] %vm107, %v378
    %383 = vst.msk [vmem:[#allocation7 + $0x18] sm:$0xff] %vm107, %v379
    // Predicated region
    $region22: #{tpu_custom_call.1} parent=1 // pred_check
      _
    $region23: #{tpu_custom_call.1} parent=1 // pred_check_branch
      %385 = sbr.rel (0) target = $region25
    $region24: #{tpu_custom_call.1} parent=1 // pred_region
      %387 = vsyncadd [#allocation4], 0
      %s388 = sshll.u32 [#allocation7], 4
      %s389 = int_to_ptr.vmem [resolvable:$true] %s388
      %s390 = sshll.u32 %s3, 4
      %s391 = int_to_ptr.hbm [resolvable:$true] %s390
      %396 = dma.vmem_to_hbm [thread:$0]  %s389, 512, %s391, [#allocation4], 128, 128, 8
    $region25: #{tpu_custom_call.1} parent=1 // pred_fallthru
      _
    // Predicated region
    $region26: #{tpu_custom_call.1} parent=1 // pred_check
      _
    $region27: #{tpu_custom_call.1} parent=1 // pred_check_branch
      %398 = sbr.rel (0) target = $region29
    $region28: #{tpu_custom_call.1} parent=1 // pred_region
      %400 = dma.done [#allocation4], 512
    $region29: #{tpu_custom_call.1} parent=1 // pred_fallthru
      _
    %401 = vsyncpa [#allocation3], 1
    %402 = vsyncpa [#allocation6], 1
    %403 = vsyncpa [#allocation4], 1

</llo_original>
